<compile_context>
chip_gen: v5e
topology: v5e:2x2
jax: 0.10.0
libtpu: 0.0.40
codegen_flags: <defaults>
</compile_context>

<pallas_src>
import functools

import jax
import jax.numpy as jnp
from jax.experimental import pallas as pl
from jax.experimental.pallas import tpu as pltpu


def _round_up(x, m):
    return ((x + m - 1) // m) * m


# ----------------------------- Pallas kernels ------------------------------

def _adj_kernel(xr_ref, xc_ref, w1_ref, b1_ref, w2_ref, b2_ref, adj_ref, *,
                alpha1, alpha2):
    xr = xr_ref[...]                                   # (tm, xd_pad) f32
    xc = xc_ref[...]                                   # (tn, xd_pad) f32
    nv1 = jnp.tanh(alpha1 * (
        jnp.dot(xr, w1_ref[...], preferred_element_type=jnp.float32)
        + b1_ref[...]))                                # (tm, dim_pad)
    nv2 = jnp.tanh(alpha1 * (
        jnp.dot(xc, w2_ref[...], preferred_element_type=jnp.float32)
        + b2_ref[...]))                                # (tn, dim_pad)
    # Contract dim 1 with dim 1 directly -- avoids an XLU transpose of nv2.
    logits = alpha2 * jax.lax.dot_general(
        nv1, nv2, dimension_numbers=(((1,), (1,)), ((), ())),
        preferred_element_type=jnp.float32)            # (tm, tn)
    adj_ref[...] = jax.nn.sigmoid(logits)


def _mask_clamp_kernel(adj_ref, thresh_ref, out_ref, *, self_loops, tm, tn):
    adj = adj_ref[...]
    thresh = thresh_ref[0, 0]
    adj = jnp.where(adj >= thresh, adj, jnp.zeros_like(adj))
    if self_loops:
        row = (jax.lax.broadcasted_iota(jnp.int32, adj.shape, 0)
               + pl.program_id(0) * tm)
        col = (jax.lax.broadcasted_iota(jnp.int32, adj.shape, 1)
               + pl.program_id(1) * tn)
        adj = jnp.where(row == col, jnp.maximum(adj, 0.5), adj)
    out_ref[...] = adj


# ------------------------------- wrapper ------------------------------------

def edge_structure_learner_forward(static_feat, w1, b1, w2, b2, *,
                                   max_num_edges, alpha1=0.1, alpha2=2.0,
                                   self_loops=True, tile_target=512):
    n, xd = static_feat.shape
    dim = w1.shape[1]
    assert w1.shape == (xd, dim) and w2.shape == (xd, dim)
    f32 = jnp.float32

    # Lane-dense padding: feature/embedding dims -> multiples of 128; node dim
    # -> multiple of the output tile.  Zero padding is exact: zero feature
    # columns contribute nothing to X @ W, and zero-padded bias entries give
    # tanh(0)=0 embedding columns that contribute nothing to nv1 @ nv2^T.
    xd_pad = _round_up(xd, 128)
    dim_pad = _round_up(dim, 128)
    tm = tn = min(tile_target, _round_up(n, 128))   # 512 tiles fit every gen's VMEM
    n_pad = _round_up(n, tm)

    x_p = jnp.zeros((n_pad, xd_pad), f32).at[:n, :xd].set(static_feat.astype(f32))
    w1_p = jnp.zeros((xd_pad, dim_pad), f32).at[:xd, :dim].set(w1.astype(f32))
    w2_p = jnp.zeros((xd_pad, dim_pad), f32).at[:xd, :dim].set(w2.astype(f32))
    b1_p = jnp.zeros((1, dim_pad), f32).at[0, :dim].set(b1.reshape(-1).astype(f32))
    b2_p = jnp.zeros((1, dim_pad), f32).at[0, :dim].set(b2.reshape(-1).astype(f32))

    grid = (n_pad // tm, n_pad // tn)

    # Kernel 1: fused linear layers + tanh + outer product + sigmoid, tiled.
    adj_pad = pl.pallas_call(
        functools.partial(_adj_kernel, alpha1=alpha1, alpha2=alpha2),
        out_shape=jax.ShapeDtypeStruct((n_pad, n_pad), f32),
        grid=grid,
        in_specs=[
            pl.BlockSpec((tm, xd_pad), lambda i, j: (i, 0)),      # X row block
            pl.BlockSpec((tn, xd_pad), lambda i, j: (j, 0)),      # X col block
            pl.BlockSpec((xd_pad, dim_pad), lambda i, j: (0, 0)),  # W1 (resident)
            pl.BlockSpec((1, dim_pad), lambda i, j: (0, 0)),       # b1
            pl.BlockSpec((xd_pad, dim_pad), lambda i, j: (0, 0)),  # W2 (resident)
            pl.BlockSpec((1, dim_pad), lambda i, j: (0, 0)),       # b2
        ],
        out_specs=pl.BlockSpec((tm, tn), lambda i, j: (i, j)),
        compiler_params=pltpu.CompilerParams(
            dimension_semantics=("parallel", "parallel")),
    )(x_p, x_p, w1_p, b1_p, w2_p, b2_p)

    # Glue: only the k-th largest value over the valid (unpadded) region is
    # needed as a scalar threshold -- no N^2 scatter mask.
    # TODO(synk): threshold masking keeps every entry tied with the k-th value,
    # so on exact float ties it may keep more than max_num_edges edges
    # (torch.topk breaks ties arbitrarily); exact-k global selection has no
    # clean Pallas equivalent.
    adj_valid = adj_pad[:n, :n].reshape(-1)
    top_vals, _ = jax.lax.top_k(adj_valid, max_num_edges)
    thresh = top_vals[max_num_edges - 1].reshape(1, 1).astype(f32)

    # Kernel 2: threshold mask + diagonal clamp(min=0.5), in place (aliased).
    out_pad = pl.pallas_call(
        functools.partial(_mask_clamp_kernel, self_loops=self_loops,
                          tm=tm, tn=tn),
        out_shape=jax.ShapeDtypeStruct((n_pad, n_pad), f32),
        grid=grid,
        in_specs=[
            pl.BlockSpec((tm, tn), lambda i, j: (i, j)),
            pl.BlockSpec(memory_space=pltpu.MemorySpace.SMEM),
        ],
        out_specs=pl.BlockSpec((tm, tn), lambda i, j: (i, j)),
        input_output_aliases={0: 0},
        compiler_params=pltpu.CompilerParams(
            dimension_semantics=("parallel", "parallel")),
    )(adj_pad, thresh)

    return out_pad[:n, :n]


# ----------------------------- reference (JAX) -------------------------------

def _reference(static_feat, w1, b1, w2, b2, *, max_num_edges, alpha1, alpha2,
               self_loops):
    nv1 = jnp.tanh(alpha1 * (static_feat @ w1 + b1))
    nv2 = jnp.tanh(alpha1 * (static_feat @ w2 + b2))
    adj = jax.nn.sigmoid(alpha2 * nv1 @ nv2.T)
    n = adj.shape[0]
    flat = adj.reshape(-1)
    _, idx = jax.lax.top_k(flat, max_num_edges)
    mask = jnp.zeros((n * n,), jnp.float32).at[idx].set(1.0)
    adj = (flat * mask).reshape(n, n)
    if self_loops:
        eye = jnp.eye(n, dtype=bool)
        adj = jnp.where(eye, jnp.maximum(adj, 0.5), adj)
    return adj


# --------------------------------- main --------------------------------------

if __name__ == "__main__":
    # Small, module-consistent shapes
    num_nodes = 16        # N
    xd = 32               # static feature dim
    dim = 32              # embedding dim of lin1/lin2
    max_num_edges = 40
    alpha1, alpha2 = 0.1, 2.0

    key = jax.random.PRNGKey(0)
    k_feat, k_w1, k_b1, k_w2, k_b2 = jax.random.split(key, 5)

    static_feat = jax.random.normal(k_feat, (num_nodes, xd), jnp.float32)

    # Deterministic parameter init (PyTorch-Linear-like uniform bound 1/sqrt(xd))
    bound = 1.0 / jnp.sqrt(jnp.float32(xd))
    w1 = jax.random.uniform(k_w1, (xd, dim), jnp.float32, -bound, bound)
    b1 = jax.random.uniform(k_b1, (dim,), jnp.float32, -bound, bound)
    w2 = jax.random.uniform(k_w2, (xd, dim), jnp.float32, -bound, bound)
    b2 = jax.random.uniform(k_b2, (dim,), jnp.float32, -bound, bound)

    fwd = jax.jit(functools.partial(
        edge_structure_learner_forward,
        max_num_edges=max_num_edges, alpha1=alpha1, alpha2=alpha2,
        self_loops=True))

    adj = fwd(static_feat, w1, b1, w2, b2)
    jax.block_until_ready(adj)

    ref = _reference(static_feat, w1, b1, w2, b2,
                     max_num_edges=max_num_edges, alpha1=alpha1,
                     alpha2=alpha2, self_loops=True)
    assert adj.shape == (num_nodes, num_nodes)
    assert jnp.allclose(adj, ref, atol=1e-4, rtol=1e-4), \
        float(jnp.abs(adj - ref).max())

    print("KERNEL_OK")
</pallas_src>

<mosaic_0001>
module attributes {stable_mosaic.version = 11 : i64} {
  func.func @_adj_kernel(%arg0: i32, %arg1: i32, %arg2: memref<128x128xf32, #tpu.memory_space<vmem>>, %arg3: memref<128x128xf32, #tpu.memory_space<vmem>>, %arg4: memref<128x128xf32, #tpu.memory_space<vmem>>, %arg5: memref<1x128xf32, #tpu.memory_space<vmem>>, %arg6: memref<128x128xf32, #tpu.memory_space<vmem>>, %arg7: memref<1x128xf32, #tpu.memory_space<vmem>>, %arg8: memref<128x128xf32, #tpu.memory_space<vmem>>) attributes {dimension_semantics = [#tpu.dimension_semantics<parallel>, #tpu.dimension_semantics<parallel>], iteration_bounds = array<i64: 1, 1>, scalar_prefetch = 0 : i64, scratch_operands = 0 : i64, tpu.core_type = #tpu.core_type<tc>, window_params = [{transform_indices = @transform_0, window_bounds = array<i64: 128, 128>}, {transform_indices = @transform_1, window_bounds = array<i64: 128, 128>}, {pipeline_mode = #tpu.pipeline_mode<synchronous>, transform_indices = @transform_2, window_bounds = array<i64: 128, 128>}, {pipeline_mode = #tpu.pipeline_mode<synchronous>, transform_indices = @transform_3, window_bounds = array<i64: 1, 128>}, {pipeline_mode = #tpu.pipeline_mode<synchronous>, transform_indices = @transform_4, window_bounds = array<i64: 128, 128>}, {pipeline_mode = #tpu.pipeline_mode<synchronous>, transform_indices = @transform_5, window_bounds = array<i64: 1, 128>}, {transform_indices = @transform_6, window_bounds = array<i64: 128, 128>}]} {
    %c0 = arith.constant 0 : index
    %c0_0 = arith.constant 0 : index
    %0 = vector.load %arg2[%c0, %c0_0] : memref<128x128xf32, #tpu.memory_space<vmem>>, vector<128x128xf32>
    %c0_1 = arith.constant 0 : index
    %c0_2 = arith.constant 0 : index
    %1 = vector.load %arg3[%c0_1, %c0_2] : memref<128x128xf32, #tpu.memory_space<vmem>>, vector<128x128xf32>
    %c0_3 = arith.constant 0 : index
    %c0_4 = arith.constant 0 : index
    %2 = vector.load %arg4[%c0_3, %c0_4] : memref<128x128xf32, #tpu.memory_space<vmem>>, vector<128x128xf32>
    %cst = arith.constant dense<0.000000e+00> : vector<128x128xf32>
    %3 = tpu.matmul %0, %2, %cst {dimension_numbers = #tpu.dot_dimension_numbers<[1], [0], [0], [1], [0, 0, 1, 1], [], []>} : vector<128x128xf32>, vector<128x128xf32>, vector<128x128xf32> -> vector<128x128xf32>
    %c0_5 = arith.constant 0 : index
    %c0_6 = arith.constant 0 : index
    %4 = vector.load %arg5[%c0_5, %c0_6] : memref<1x128xf32, #tpu.memory_space<vmem>>, vector<1x128xf32>
    %5 = vector.broadcast %4 : vector<1x128xf32> to vector<128x128xf32>
    %6 = arith.addf %3, %5 : vector<128x128xf32>
    %cst_7 = arith.constant 1.000000e-01 : f32
    %7 = vector.broadcast %cst_7 : f32 to vector<128x128xf32>
    %8 = arith.mulf %7, %6 : vector<128x128xf32>
    %9 = math.tanh %8 : vector<128x128xf32>
    %c0_8 = arith.constant 0 : index
    %c0_9 = arith.constant 0 : index
    %10 = vector.load %arg6[%c0_8, %c0_9] : memref<128x128xf32, #tpu.memory_space<vmem>>, vector<128x128xf32>
    %cst_10 = arith.constant dense<0.000000e+00> : vector<128x128xf32>
    %11 = tpu.matmul %1, %10, %cst_10 {dimension_numbers = #tpu.dot_dimension_numbers<[1], [0], [0], [1], [0, 0, 1, 1], [], []>} : vector<128x128xf32>, vector<128x128xf32>, vector<128x128xf32> -> vector<128x128xf32>
    %c0_11 = arith.constant 0 : index
    %c0_12 = arith.constant 0 : index
    %12 = vector.load %arg7[%c0_11, %c0_12] : memref<1x128xf32, #tpu.memory_space<vmem>>, vector<1x128xf32>
    %13 = vector.broadcast %12 : vector<1x128xf32> to vector<128x128xf32>
    %14 = arith.addf %11, %13 : vector<128x128xf32>
    %cst_13 = arith.constant 1.000000e-01 : f32
    %15 = vector.broadcast %cst_13 : f32 to vector<128x128xf32>
    %16 = arith.mulf %15, %14 : vector<128x128xf32>
    %17 = math.tanh %16 : vector<128x128xf32>
    %cst_14 = arith.constant dense<0.000000e+00> : vector<128x128xf32>
    %18 = tpu.matmul %9, %17, %cst_14 {dimension_numbers = #tpu.dot_dimension_numbers<[1], [1], [0], [0], [0, 0, 1, 0], [], []>} : vector<128x128xf32>, vector<128x128xf32>, vector<128x128xf32> -> vector<128x128xf32>
    %cst_15 = arith.constant 2.000000e+00 : f32
    %19 = vector.broadcast %cst_15 : f32 to vector<128x128xf32>
    %20 = arith.mulf %19, %18 : vector<128x128xf32>
    %21 = arith.negf %20 : vector<128x128xf32>
    %22 = math.exp %21 : vector<128x128xf32>
    %cst_16 = arith.constant 1.000000e+00 : f32
    %23 = vector.broadcast %cst_16 : f32 to vector<128x128xf32>
    %24 = arith.addf %23, %22 : vector<128x128xf32>
    %25 = arith.divf %23, %24 : vector<128x128xf32>
    %c0_17 = arith.constant 0 : index
    %c0_18 = arith.constant 0 : index
    %26 = vector.load %arg8[%c0_17, %c0_18] : memref<128x128xf32, #tpu.memory_space<vmem>>, vector<128x128xf32>
    tpu.vector_store %arg8[%c0_17, %c0_18], %25 {strides = array<i32>} : memref<128x128xf32, #tpu.memory_space<vmem>>, vector<128x128xf32>,
    return
  }
  func.func @transform_0(%arg0: i32, %arg1: i32) -> (i32, i32) {
    %c0_i32 = arith.constant 0 : i32
    %c0_i32_0 = arith.constant 0 : i32
    return %arg0, %c0_i32 : i32, i32
  }
  func.func @transform_1(%arg0: i32, %arg1: i32) -> (i32, i32) {
    %c0_i32 = arith.constant 0 : i32
    %c0_i32_0 = arith.constant 0 : i32
    return %arg1, %c0_i32 : i32, i32
  }
  func.func @transform_2(%arg0: i32, %arg1: i32) -> (i32, i32) {
    %c0_i32 = arith.constant 0 : i32
    %c0_i32_0 = arith.constant 0 : i32
    %c0_i32_1 = arith.constant 0 : i32
    return %c0_i32, %c0_i32_0 : i32, i32
  }
  func.func @transform_3(%arg0: i32, %arg1: i32) -> (i32, i32) {
    %c0_i32 = arith.constant 0 : i32
    %c0_i32_0 = arith.constant 0 : i32
    %c0_i32_1 = arith.constant 0 : i32
    return %c0_i32, %c0_i32_0 : i32, i32
  }
  func.func @transform_4(%arg0: i32, %arg1: i32) -> (i32, i32) {
    %c0_i32 = arith.constant 0 : i32
    %c0_i32_0 = arith.constant 0 : i32
    %c0_i32_1 = arith.constant 0 : i32
    return %c0_i32, %c0_i32_0 : i32, i32
  }
  func.func @transform_5(%arg0: i32, %arg1: i32) -> (i32, i32) {
    %c0_i32 = arith.constant 0 : i32
    %c0_i32_0 = arith.constant 0 : i32
    %c0_i32_1 = arith.constant 0 : i32
    return %c0_i32, %c0_i32_0 : i32, i32
  }
  func.func @transform_6(%arg0: i32, %arg1: i32) -> (i32, i32) {
    %c0_i32 = arith.constant 0 : i32
    return %arg0, %arg1 : i32, i32
  }
}

module attributes {stable_mosaic.version = 11 : i64} {
  func.func @_mask_clamp_kernel(%arg0: i32, %arg1: i32, %arg2: memref<128x128xf32, #tpu.memory_space<vmem>>, %arg3: memref<1x1xf32, #tpu.memory_space<smem>>, %arg4: memref<128x128xf32, #tpu.memory_space<vmem>>) attributes {dimension_semantics = [#tpu.dimension_semantics<parallel>, #tpu.dimension_semantics<parallel>], iteration_bounds = array<i64: 1, 1>, scalar_prefetch = 0 : i64, scratch_operands = 0 : i64, tpu.core_type = #tpu.core_type<tc>, window_params = [{transform_indices = @transform_0, window_bounds = array<i64: 128, 128>}, {transform_indices = @transform_1, window_bounds = array<i64: 1, 1>}, {transform_indices = @transform_2, window_bounds = array<i64: 128, 128>}]} {
    %c0 = arith.constant 0 : index
    %c0_0 = arith.constant 0 : index
    %0 = vector.load %arg2[%c0, %c0_0] : memref<128x128xf32, #tpu.memory_space<vmem>>, vector<128x128xf32>
    %c0_1 = arith.constant 0 : index
    %c0_2 = arith.constant 0 : index
    %1 = memref.load %arg3[%c0_1, %c0_2] : memref<1x1xf32, #tpu.memory_space<smem>>
    %2 = vector.broadcast %1 : f32 to vector<128x128xf32>
    %3 = arith.cmpf oge, %0, %2 : vector<128x128xf32>
    %cst = arith.constant 0.000000e+00 : f32
    %4 = vector.broadcast %cst : f32 to vector<128x128xf32>
    %5 = arith.select %3, %0, %4 : vector<128x128xi1>, vector<128x128xf32>
    %6 = tpu.iota {dimensions = array<i32: 0>} : vector<128x128xi32>
    %c128_i32 = arith.constant 128 : i32
    %7 = arith.muli %arg0, %c128_i32 : i32
    %8 = vector.broadcast %7 : i32 to vector<128x128xi32>
    %9 = arith.addi %6, %8 : vector<128x128xi32>
    %10 = tpu.iota {dimensions = array<i32: 1>} : vector<128x128xi32>
    %c128_i32_3 = arith.constant 128 : i32
    %11 = arith.muli %arg1, %c128_i32_3 : i32
    %12 = vector.broadcast %11 : i32 to vector<128x128xi32>
    %13 = arith.addi %10, %12 : vector<128x128xi32>
    %14 = arith.cmpi eq, %9, %13 : vector<128x128xi32>
    %cst_4 = arith.constant 5.000000e-01 : f32
    %15 = vector.broadcast %cst_4 : f32 to vector<128x128xf32>
    %16 = arith.maximumf %5, %15 : vector<128x128xf32>
    %17 = arith.select %14, %16, %5 : vector<128x128xi1>, vector<128x128xf32>
    %c0_5 = arith.constant 0 : index
    %c0_6 = arith.constant 0 : index
    %18 = vector.load %arg4[%c0_5, %c0_6] : memref<128x128xf32, #tpu.memory_space<vmem>>, vector<128x128xf32>
    tpu.vector_store %arg4[%c0_5, %c0_6], %17 {strides = array<i32>} : memref<128x128xf32, #tpu.memory_space<vmem>>, vector<128x128xf32>,
    return
  }
  func.func @transform_0(%arg0: i32, %arg1: i32) -> (i32, i32) {
    %c0_i32 = arith.constant 0 : i32
    return %arg0, %arg1 : i32, i32
  }
  func.func @transform_1(%arg0: i32, %arg1: i32) -> (i32, i32) {
    %c0_i32 = arith.constant 0 : i32
    %c0_i32_0 = arith.constant 0 : i32
    %c0_i32_1 = arith.constant 0 : i32
    return %c0_i32, %c0_i32_0 : i32, i32
  }
  func.func @transform_2(%arg0: i32, %arg1: i32) -> (i32, i32) {
    %c0_i32 = arith.constant 0 : i32
    return %arg0, %arg1 : i32, i32
  }
}

</mosaic_0001>

<llo_original>
// kernel: edge_structure_learner_forward.3
$region0: #{edge_structure_learner_forward.3}
  #allocation0 [shape = 'u32[]', space=smem, size = 0x4, offset = 0x4, fixed_abs, tag = 'smem constant byte address 0x4 - core index']
  #allocation1 [shape = 'u32[72,128]{1,0:T(1,128)}', space=vmem, size = 0x9000, scoped, tag = 'internal scratch']
  #allocation2 [shape = 'f32[1,1]{1,0:T(1,128)S(6)}', space=smem, size = 0x200, scoped, tag = 'scoped memory for edge_structure_learner_forward.3']
  %s0 = inlined_call_operand.vmem [shape: f32[128,128], index: 0, kind: input, shape index: {}, may-alias: {0,2}]
  %s1 = inlined_call_operand.<no memory space> [shape: f32[1,1], index: 1, kind: input, shape index: {}]
  %s2 = inlined_call_operand.vmem [shape: f32[128,128], index: 2, kind: output, shape index: {}, may-alias: {0,2}]
  %s3 = sld [smem:[#allocation0]]
  $region18: #{edge_structure_learner_forward.3} parent=0
    _
  %s5 = ssub.s32 1, %s3
  %s6 = scalar_select 0, %s5, %s3
  %7 = sst [smem:[#allocation2]] %s1
  // Predicated region
  $region2: #{edge_structure_learner_forward.3} parent=0 // pred_check
    _
  $region3: #{edge_structure_learner_forward.3} parent=0 // pred_check_branch
    %9 = sbr.rel (0) target = $region5
  $region4: #{edge_structure_learner_forward.3} parent=0 // pred_region
    _
  $region5: #{edge_structure_learner_forward.3} parent=0 // pred_fallthru
    _
  // Predicated region
  $region6: #{edge_structure_learner_forward.3} parent=0 // pred_check
    _
  $region7: #{edge_structure_learner_forward.3} parent=0 // pred_check_branch
    %11 = sbr.rel (0) target = $region9
  $region8: #{edge_structure_learner_forward.3} parent=0 // pred_region
    _
  $region9: #{edge_structure_learner_forward.3} parent=0 // pred_fallthru
    _
  %v12 = vld [vmem:[%s0] sm:$0xff]
  %v13 = vld [vmem:[%s0 + $0x8] sm:$0xff]
  %v14 = vld [vmem:[%s0 + $0x10] sm:$0xff]
  %v15 = vld [vmem:[%s0 + $0x18] sm:$0xff]
  %v16 = vld [vmem:[%s0 + $0x20] sm:$0xff]
  %v17 = vld [vmem:[%s0 + $0x28] sm:$0xff]
  %v18 = vld [vmem:[%s0 + $0x30] sm:$0xff]
  %v19 = vld [vmem:[%s0 + $0x38] sm:$0xff]
  %v20 = vld [vmem:[%s0 + $0x40] sm:$0xff]
  %v21 = vld [vmem:[%s0 + $0x48] sm:$0xff]
  %v22 = vld [vmem:[%s0 + $0x50] sm:$0xff]
  %v23 = vld [vmem:[%s0 + $0x58] sm:$0xff]
  %v24 = vld [vmem:[%s0 + $0x60] sm:$0xff]
  %v25 = vld [vmem:[%s0 + $0x68] sm:$0xff]
  %v26 = vld [vmem:[%s0 + $0x70] sm:$0xff]
  %v27 = vld [vmem:[%s0 + $0x78] sm:$0xff]
  %s28 = sld [smem:[#allocation2]]
  %v29 = vstv %s28
  %vm30 = vcmp.ge.f32.partialorder %v12, %v29
  %vm31 = vcmp.ge.f32.partialorder %v13, %v29
  %vm32 = vcmp.ge.f32.partialorder %v14, %v29
  %vm33 = vcmp.ge.f32.partialorder %v15, %v29
  %vm34 = vcmp.ge.f32.partialorder %v16, %v29
  %vm35 = vcmp.ge.f32.partialorder %v17, %v29
  %vm36 = vcmp.ge.f32.partialorder %v18, %v29
  %vm37 = vcmp.ge.f32.partialorder %v19, %v29
  %vm38 = vcmp.ge.f32.partialorder %v20, %v29
  %vm39 = vcmp.ge.f32.partialorder %v21, %v29
  %vm40 = vcmp.ge.f32.partialorder %v22, %v29
  %vm41 = vcmp.ge.f32.partialorder %v23, %v29
  %vm42 = vcmp.ge.f32.partialorder %v24, %v29
  %vm43 = vcmp.ge.f32.partialorder %v25, %v29
  %vm44 = vcmp.ge.f32.partialorder %v26, %v29
  %vm45 = vcmp.ge.f32.partialorder %v27, %v29
  %v46 = vsel %vm30, %v12, 0.0
  %v47 = vsel %vm31, %v13, 0.0
  %v48 = vsel %vm32, %v14, 0.0
  %v49 = vsel %vm33, %v15, 0.0
  %v50 = vsel %vm34, %v16, 0.0
  %v51 = vsel %vm35, %v17, 0.0
  %v52 = vsel %vm36, %v18, 0.0
  %v53 = vsel %vm37, %v19, 0.0
  %v54 = vsel %vm38, %v20, 0.0
  %v55 = vsel %vm39, %v21, 0.0
  %v56 = vsel %vm40, %v22, 0.0
  %v57 = vsel %vm41, %v23, 0.0
  %v58 = vsel %vm42, %v24, 0.0
  %v59 = vsel %vm43, %v25, 0.0
  %v60 = vsel %vm44, %v26, 0.0
  %v61 = vsel %vm45, %v27, 0.0
  %v62 = vlaneseq
  %v63 = vshrl.u32 %v62, 7
  %v64 = vadd.s32 %v63, 8
  %v65 = vadd.s32 %v63, 16
  %v66 = vadd.s32 %v63, 24
  %v67 = vadd.s32 %v63, 32
  %v68 = vadd.s32 %v63, 40
  %v69 = vadd.s32 %v63, 48
  %v70 = vadd.s32 %v63, 56
  %v71 = vadd.s32 %v63, 64
  %v72 = vadd.s32 %v63, 72
  %v73 = vadd.s32 %v63, 80
  %v74 = vadd.s32 %v63, 88
  %v75 = vadd.s32 %v63, 96
  %v76 = vadd.s32 %v63, 104
  %v77 = vadd.s32 %v63, 112
  %v78 = vadd.s32 %v63, 120
  %s79 = smul.u32 0, 128
  %v80 = vstv %s79
  %v81 = vadd.s32 %v63, %v80
  %v82 = vadd.s32 %v64, %v80
  %v83 = vadd.s32 %v65, %v80
  %v84 = vadd.s32 %v66, %v80
  %v85 = vadd.s32 %v67, %v80
  %v86 = vadd.s32 %v68, %v80
  %v87 = vadd.s32 %v69, %v80
  %v88 = vadd.s32 %v70, %v80
  %v89 = vadd.s32 %v71, %v80
  %v90 = vadd.s32 %v72, %v80
  %v91 = vadd.s32 %v73, %v80
  %v92 = vadd.s32 %v74, %v80
  %v93 = vadd.s32 %v75, %v80
  %v94 = vadd.s32 %v76, %v80
  %v95 = vadd.s32 %v77, %v80
  %v96 = vadd.s32 %v78, %v80
  %v97 = vlaneseq
  %v98 = vand.u32 %v97, 127
  %s99 = smul.u32 0, 128
  %v100 = vstv %s99
  %v101 = vadd.s32 %v98, %v100
  %vm102 = vcmp.eq.s32.totalorder %v81, %v101
  %vm103 = vcmp.eq.s32.totalorder %v82, %v101
  %vm104 = vcmp.eq.s32.totalorder %v83, %v101
  %vm105 = vcmp.eq.s32.totalorder %v84, %v101
  %vm106 = vcmp.eq.s32.totalorder %v85, %v101
  %vm107 = vcmp.eq.s32.totalorder %v86, %v101
  %vm108 = vcmp.eq.s32.totalorder %v87, %v101
  %vm109 = vcmp.eq.s32.totalorder %v88, %v101
  %vm110 = vcmp.eq.s32.totalorder %v89, %v101
  %vm111 = vcmp.eq.s32.totalorder %v90, %v101
  %vm112 = vcmp.eq.s32.totalorder %v91, %v101
  %vm113 = vcmp.eq.s32.totalorder %v92, %v101
  %vm114 = vcmp.eq.s32.totalorder %v93, %v101
  %vm115 = vcmp.eq.s32.totalorder %v94, %v101
  %vm116 = vcmp.eq.s32.totalorder %v95, %v101
  %vm117 = vcmp.eq.s32.totalorder %v96, %v101
  %v118 = vmax.f32 %v46, 0.5
  %v119 = vmax.f32 %v47, 0.5
  %v120 = vmax.f32 %v48, 0.5
  %v121 = vmax.f32 %v49, 0.5
  %v122 = vmax.f32 %v50, 0.5
  %v123 = vmax.f32 %v51, 0.5
  %v124 = vmax.f32 %v52, 0.5
  %v125 = vmax.f32 %v53, 0.5
  %v126 = vmax.f32 %v54, 0.5
  %v127 = vmax.f32 %v55, 0.5
  %v128 = vmax.f32 %v56, 0.5
  %v129 = vmax.f32 %v57, 0.5
  %v130 = vmax.f32 %v58, 0.5
  %v131 = vmax.f32 %v59, 0.5
  %v132 = vmax.f32 %v60, 0.5
  %v133 = vmax.f32 %v61, 0.5
  %v134 = vsel %vm102, %v118, %v46
  %v135 = vsel %vm103, %v119, %v47
  %v136 = vsel %vm104, %v120, %v48
  %v137 = vsel %vm105, %v121, %v49
  %v138 = vsel %vm106, %v122, %v50
  %v139 = vsel %vm107, %v123, %v51
  %v140 = vsel %vm108, %v124, %v52
  %v141 = vsel %vm109, %v125, %v53
  %v142 = vsel %vm110, %v126, %v54
  %v143 = vsel %vm111, %v127, %v55
  %v144 = vsel %vm112, %v128, %v56
  %v145 = vsel %vm113, %v129, %v57
  %v146 = vsel %vm114, %v130, %v58
  %v147 = vsel %vm115, %v131, %v59
  %v148 = vsel %vm116, %v132, %v60
  %v149 = vsel %vm117, %v133, %v61
  %150 = vst [vmem:[%s2] sm:$0xff] %v134
  %151 = vst [vmem:[%s2 + $0x8] sm:$0xff] %v135
  %152 = vst [vmem:[%s2 + $0x10] sm:$0xff] %v136
  %153 = vst [vmem:[%s2 + $0x18] sm:$0xff] %v137
  %154 = vst [vmem:[%s2 + $0x20] sm:$0xff] %v138
  %155 = vst [vmem:[%s2 + $0x28] sm:$0xff] %v139
  %156 = vst [vmem:[%s2 + $0x30] sm:$0xff] %v140
  %157 = vst [vmem:[%s2 + $0x38] sm:$0xff] %v141
  %158 = vst [vmem:[%s2 + $0x40] sm:$0xff] %v142
  %159 = vst [vmem:[%s2 + $0x48] sm:$0xff] %v143
  %160 = vst [vmem:[%s2 + $0x50] sm:$0xff] %v144
  %161 = vst [vmem:[%s2 + $0x58] sm:$0xff] %v145
  %162 = vst [vmem:[%s2 + $0x60] sm:$0xff] %v146
  %163 = vst [vmem:[%s2 + $0x68] sm:$0xff] %v147
  %164 = vst [vmem:[%s2 + $0x70] sm:$0xff] %v148
  %165 = vst [vmem:[%s2 + $0x78] sm:$0xff] %v149
  // Predicated region
  $region10: #{edge_structure_learner_forward.3} parent=0 // pred_check
    _
  $region11: #{edge_structure_learner_forward.3} parent=0 // pred_check_branch
    %167 = sbr.rel (0) target = $region13
  $region12: #{edge_structure_learner_forward.3} parent=0 // pred_region
    _
  $region13: #{edge_structure_learner_forward.3} parent=0 // pred_fallthru
    _
  // Predicated region
  $region14: #{edge_structure_learner_forward.3} parent=0 // pred_check
    _
  $region15: #{edge_structure_learner_forward.3} parent=0 // pred_check_branch
    %169 = sbr.rel (0) target = $region17
  $region16: #{edge_structure_learner_forward.3} parent=0 // pred_region
    _
  $region17: #{edge_structure_learner_forward.3} parent=0 // pred_fallthru
    _

// kernel: edge_structure_learner_forward.2
$region0: #{edge_structure_learner_forward.2}
  #allocation0 [shape = 'u32[]', space=smem, size = 0x4, offset = 0x4, fixed_abs, tag = 'smem constant byte address 0x4 - core index']
  #allocation1 [shape = 'u32[72,128]{1,0:T(1,128)}', space=vmem, size = 0x9000, scoped, tag = 'internal scratch']
  %s0 = inlined_call_operand.vmem [shape: f32[128,128], index: 0, kind: input, shape index: {}, may-alias: {0,1}]
  %s1 = inlined_call_operand.vmem [shape: f32[128,128], index: 1, kind: input, shape index: {}, may-alias: {0,1}]
  %s2 = inlined_call_operand.vmem [shape: f32[128,128], index: 2, kind: input, shape index: {}]
  %s3 = inlined_call_operand.vmem [shape: f32[1,128], index: 3, kind: input, shape index: {}]
  %s4 = inlined_call_operand.vmem [shape: f32[128,128], index: 4, kind: input, shape index: {}]
  %s5 = inlined_call_operand.vmem [shape: f32[1,128], index: 5, kind: input, shape index: {}]
  %s6 = inlined_call_operand.vmem [shape: f32[128,128], index: 6, kind: output, shape index: {}]
  %s7 = sld [smem:[#allocation0]]
  $region34: #{edge_structure_learner_forward.2} parent=0
    _
  %s9 = ssub.s32 1, %s7
  %s10 = scalar_select 0, %s9, %s7
  // Predicated region
  $region2: #{edge_structure_learner_forward.2} parent=0 // pred_check
    _
  $region3: #{edge_structure_learner_forward.2} parent=0 // pred_check_branch
    %12 = sbr.rel (0) target = $region5
  $region4: #{edge_structure_learner_forward.2} parent=0 // pred_region
    _
  $region5: #{edge_structure_learner_forward.2} parent=0 // pred_fallthru
    _
  // Predicated region
  $region6: #{edge_structure_learner_forward.2} parent=0 // pred_check
    _
  $region7: #{edge_structure_learner_forward.2} parent=0 // pred_check_branch
    %14 = sbr.rel (0) target = $region9
  $region8: #{edge_structure_learner_forward.2} parent=0 // pred_region
    _
  $region9: #{edge_structure_learner_forward.2} parent=0 // pred_fallthru
    _
  // Predicated region
  $region10: #{edge_structure_learner_forward.2} parent=0 // pred_check
    _
  $region11: #{edge_structure_learner_forward.2} parent=0 // pred_check_branch
    %16 = sbr.rel (0) target = $region13
  $region12: #{edge_structure_learner_forward.2} parent=0 // pred_region
    _
  $region13: #{edge_structure_learner_forward.2} parent=0 // pred_fallthru
    _
  // Predicated region
  $region14: #{edge_structure_learner_forward.2} parent=0 // pred_check
    _
  $region15: #{edge_structure_learner_forward.2} parent=0 // pred_check_branch
    %18 = sbr.rel (0) target = $region17
  $region16: #{edge_structure_learner_forward.2} parent=0 // pred_region
    _
  $region17: #{edge_structure_learner_forward.2} parent=0 // pred_fallthru
    _
  // Predicated region
  $region18: #{edge_structure_learner_forward.2} parent=0 // pred_check
    _
  $region19: #{edge_structure_learner_forward.2} parent=0 // pred_check_branch
    %20 = sbr.rel (0) target = $region21
  $region20: #{edge_structure_learner_forward.2} parent=0 // pred_region
    _
  $region21: #{edge_structure_learner_forward.2} parent=0 // pred_fallthru
    _
  // Predicated region
  $region22: #{edge_structure_learner_forward.2} parent=0 // pred_check
    _
  $region23: #{edge_structure_learner_forward.2} parent=0 // pred_check_branch
    %22 = sbr.rel (0) target = $region25
  $region24: #{edge_structure_learner_forward.2} parent=0 // pred_region
    _
  $region25: #{edge_structure_learner_forward.2} parent=0 // pred_fallthru
    _
  %v23 = vld [vmem:[%s0] sm:$0xff]
  %v24 = vld [vmem:[%s0 + $0x8] sm:$0xff]
  %v25 = vld [vmem:[%s0 + $0x10] sm:$0xff]
  %v26 = vld [vmem:[%s0 + $0x18] sm:$0xff]
  %v27 = vld [vmem:[%s0 + $0x20] sm:$0xff]
  %v28 = vld [vmem:[%s0 + $0x28] sm:$0xff]
  %v29 = vld [vmem:[%s0 + $0x30] sm:$0xff]
  %v30 = vld [vmem:[%s0 + $0x38] sm:$0xff]
  %v31 = vld [vmem:[%s0 + $0x40] sm:$0xff]
  %v32 = vld [vmem:[%s0 + $0x48] sm:$0xff]
  %v33 = vld [vmem:[%s0 + $0x50] sm:$0xff]
  %v34 = vld [vmem:[%s0 + $0x58] sm:$0xff]
  %v35 = vld [vmem:[%s0 + $0x60] sm:$0xff]
  %v36 = vld [vmem:[%s0 + $0x68] sm:$0xff]
  %v37 = vld [vmem:[%s0 + $0x70] sm:$0xff]
  %v38 = vld [vmem:[%s0 + $0x78] sm:$0xff]
  %v39 = vld [vmem:[%s1] sm:$0xff]
  %v40 = vld [vmem:[%s1 + $0x8] sm:$0xff]
  %v41 = vld [vmem:[%s1 + $0x10] sm:$0xff]
  %v42 = vld [vmem:[%s1 + $0x18] sm:$0xff]
  %v43 = vld [vmem:[%s1 + $0x20] sm:$0xff]
  %v44 = vld [vmem:[%s1 + $0x28] sm:$0xff]
  %v45 = vld [vmem:[%s1 + $0x30] sm:$0xff]
  %v46 = vld [vmem:[%s1 + $0x38] sm:$0xff]
  %v47 = vld [vmem:[%s1 + $0x40] sm:$0xff]
  %v48 = vld [vmem:[%s1 + $0x48] sm:$0xff]
  %v49 = vld [vmem:[%s1 + $0x50] sm:$0xff]
  %v50 = vld [vmem:[%s1 + $0x58] sm:$0xff]
  %v51 = vld [vmem:[%s1 + $0x60] sm:$0xff]
  %v52 = vld [vmem:[%s1 + $0x68] sm:$0xff]
  %v53 = vld [vmem:[%s1 + $0x70] sm:$0xff]
  %v54 = vld [vmem:[%s1 + $0x78] sm:$0xff]
  %v55 = vld [vmem:[%s2] sm:$0xff]
  %v56 = vld [vmem:[%s2 + $0x8] sm:$0xff]
  %v57 = vld [vmem:[%s2 + $0x10] sm:$0xff]
  %v58 = vld [vmem:[%s2 + $0x18] sm:$0xff]
  %v59 = vld [vmem:[%s2 + $0x20] sm:$0xff]
  %v60 = vld [vmem:[%s2 + $0x28] sm:$0xff]
  %v61 = vld [vmem:[%s2 + $0x30] sm:$0xff]
  %v62 = vld [vmem:[%s2 + $0x38] sm:$0xff]
  %v63 = vld [vmem:[%s2 + $0x40] sm:$0xff]
  %v64 = vld [vmem:[%s2 + $0x48] sm:$0xff]
  %v65 = vld [vmem:[%s2 + $0x50] sm:$0xff]
  %v66 = vld [vmem:[%s2 + $0x58] sm:$0xff]
  %v67 = vld [vmem:[%s2 + $0x60] sm:$0xff]
  %v68 = vld [vmem:[%s2 + $0x68] sm:$0xff]
  %v69 = vld [vmem:[%s2 + $0x70] sm:$0xff]
  %v70 = vld [vmem:[%s2 + $0x78] sm:$0xff]
  %v71 = vld [vmem:[%s3] sm:$0x1]
  %v73 = vperm.slane %v71, 0
  %75 = vmatpush.msra.mxu0 %v70
  %76 = vmatpush.msra.mxu0 %v69
  %77 = vmatpush.msra.mxu0 %v68
  %78 = vmatpush.msra.mxu0 %v67
  %79 = vmatpush.msra.mxu0 %v66
  %80 = vmatpush.msra.mxu0 %v65
  %81 = vmatpush.msra.mxu0 %v64
  %82 = vmatpush.msra.mxu0 %v63
  %83 = vmatpush.msra.mxu0 %v62
  %84 = vmatpush.msra.mxu0 %v61
  %85 = vmatpush.msra.mxu0 %v60
  %86 = vmatpush.msra.mxu0 %v59
  %87 = vmatpush.msra.mxu0 %v58
  %88 = vmatpush.msra.mxu0 %v57
  %89 = vmatpush.msra.mxu0 %v56
  %90 = vmatpush.msra.mxu0 %v55
  %91 = vmatmul.f32.gmra.mxu0 %v23
  %v92 = vpop.f32.mrf.mxu0
  %v93 = vadd.f32 %v73, %v92
  %94 = vmatmul.f32.gmra.mxu0 %v24
  %v95 = vpop.f32.mrf.mxu0
  %v96 = vadd.f32 %v73, %v95
  %97 = vmatmul.f32.gmra.mxu0 %v25
  %v98 = vpop.f32.mrf.mxu0
  %v99 = vadd.f32 %v73, %v98
  %100 = vmatmul.f32.gmra.mxu0 %v26
  %v101 = vpop.f32.mrf.mxu0
  %v102 = vadd.f32 %v73, %v101
  %103 = vmatmul.f32.gmra.mxu0 %v27
  %v104 = vpop.f32.mrf.mxu0
  %v105 = vadd.f32 %v73, %v104
  %106 = vmatmul.f32.gmra.mxu0 %v28
  %v107 = vpop.f32.mrf.mxu0
  %v108 = vadd.f32 %v73, %v107
  %109 = vmatmul.f32.gmra.mxu0 %v29
  %v110 = vpop.f32.mrf.mxu0
  %v111 = vadd.f32 %v73, %v110
  %112 = vmatmul.f32.gmra.mxu0 %v30
  %v113 = vpop.f32.mrf.mxu0
  %v114 = vadd.f32 %v73, %v113
  %115 = vmatmul.f32.gmra.mxu0 %v31
  %v116 = vpop.f32.mrf.mxu0
  %v117 = vadd.f32 %v73, %v116
  %118 = vmatmul.f32.gmra.mxu0 %v32
  %v119 = vpop.f32.mrf.mxu0
  %v120 = vadd.f32 %v73, %v119
  %121 = vmatmul.f32.gmra.mxu0 %v33
  %v122 = vpop.f32.mrf.mxu0
  %v123 = vadd.f32 %v73, %v122
  %124 = vmatmul.f32.gmra.mxu0 %v34
  %v125 = vpop.f32.mrf.mxu0
  %v126 = vadd.f32 %v73, %v125
  %127 = vmatmul.f32.gmra.mxu0 %v35
  %v128 = vpop.f32.mrf.mxu0
  %v129 = vadd.f32 %v73, %v128
  %130 = vmatmul.f32.gmra.mxu0 %v36
  %v131 = vpop.f32.mrf.mxu0
  %v132 = vadd.f32 %v73, %v131
  %133 = vmatmul.f32.gmra.mxu0 %v37
  %v134 = vpop.f32.mrf.mxu0
  %v135 = vadd.f32 %v73, %v134
  %136 = vmatmul.f32.gmra.mxu0 %v38
  %v137 = vpop.f32.mrf.mxu0
  %v138 = vadd.f32 %v73, %v137
  %139 = vdwg.mxu0
  %v140 = vmul.f32 %v93, 0.1
  %v141 = vmul.f32 %v96, 0.1
  %v142 = vmul.f32 %v99, 0.1
  %v143 = vmul.f32 %v102, 0.1
  %v144 = vmul.f32 %v105, 0.1
  %v145 = vmul.f32 %v108, 0.1
  %v146 = vmul.f32 %v111, 0.1
  %v147 = vmul.f32 %v114, 0.1
  %v148 = vmul.f32 %v117, 0.1
  %v149 = vmul.f32 %v120, 0.1
  %v150 = vmul.f32 %v123, 0.1
  %v151 = vmul.f32 %v126, 0.1
  %v152 = vmul.f32 %v129, 0.1
  %v153 = vmul.f32 %v132, 0.1
  %v154 = vmul.f32 %v135, 0.1
  %v155 = vmul.f32 %v138, 0.1
  %v156 = vtanh.pop %v140
  %v157 = vtanh.pop %v141
  %v158 = vtanh.pop %v142
  %v159 = vtanh.pop %v143
  %v160 = vtanh.pop %v144
  %v161 = vtanh.pop %v145
  %v162 = vtanh.pop %v146
  %v163 = vtanh.pop %v147
  %v164 = vtanh.pop %v148
  %v165 = vtanh.pop %v149
  %v166 = vtanh.pop %v150
  %v167 = vtanh.pop %v151
  %v168 = vtanh.pop %v152
  %v169 = vtanh.pop %v153
  %v170 = vtanh.pop %v154
  %v171 = vtanh.pop %v155
  %v172 = vld [vmem:[%s4] sm:$0xff]
  %v173 = vld [vmem:[%s4 + $0x8] sm:$0xff]
  %v174 = vld [vmem:[%s4 + $0x10] sm:$0xff]
  %v175 = vld [vmem:[%s4 + $0x18] sm:$0xff]
  %v176 = vld [vmem:[%s4 + $0x20] sm:$0xff]
  %v177 = vld [vmem:[%s4 + $0x28] sm:$0xff]
  %v178 = vld [vmem:[%s4 + $0x30] sm:$0xff]
  %v179 = vld [vmem:[%s4 + $0x38] sm:$0xff]
  %v180 = vld [vmem:[%s4 + $0x40] sm:$0xff]
  %v181 = vld [vmem:[%s4 + $0x48] sm:$0xff]
  %v182 = vld [vmem:[%s4 + $0x50] sm:$0xff]
  %v183 = vld [vmem:[%s4 + $0x58] sm:$0xff]
  %v184 = vld [vmem:[%s4 + $0x60] sm:$0xff]
  %v185 = vld [vmem:[%s4 + $0x68] sm:$0xff]
  %v186 = vld [vmem:[%s4 + $0x70] sm:$0xff]
  %v187 = vld [vmem:[%s4 + $0x78] sm:$0xff]
  %v188 = vld [vmem:[%s5] sm:$0x1]
  %v190 = vperm.slane %v188, 0
  %192 = vmatpush.msra.mxu0 %v187
  %193 = vmatpush.msra.mxu0 %v186
  %194 = vmatpush.msra.mxu0 %v185
  %195 = vmatpush.msra.mxu0 %v184
  %196 = vmatpush.msra.mxu0 %v183
  %197 = vmatpush.msra.mxu0 %v182
  %198 = vmatpush.msra.mxu0 %v181
  %199 = vmatpush.msra.mxu0 %v180
  %200 = vmatpush.msra.mxu0 %v179
  %201 = vmatpush.msra.mxu0 %v178
  %202 = vmatpush.msra.mxu0 %v177
  %203 = vmatpush.msra.mxu0 %v176
  %204 = vmatpush.msra.mxu0 %v175
  %205 = vmatpush.msra.mxu0 %v174
  %206 = vmatpush.msra.mxu0 %v173
  %207 = vmatpush.msra.mxu0 %v172
  %208 = vmatmul.f32.gmra.mxu0 %v39
  %v209 = vpop.f32.mrf.mxu0
  %v210 = vadd.f32 %v190, %v209
  %211 = vmatmul.f32.gmra.mxu0 %v40
  %v212 = vpop.f32.mrf.mxu0
  %v213 = vadd.f32 %v190, %v212
  %214 = vmatmul.f32.gmra.mxu0 %v41
  %v215 = vpop.f32.mrf.mxu0
  %v216 = vadd.f32 %v190, %v215
  %217 = vmatmul.f32.gmra.mxu0 %v42
  %v218 = vpop.f32.mrf.mxu0
  %v219 = vadd.f32 %v190, %v218
  %220 = vmatmul.f32.gmra.mxu0 %v43
  %v221 = vpop.f32.mrf.mxu0
  %v222 = vadd.f32 %v190, %v221
  %223 = vmatmul.f32.gmra.mxu0 %v44
  %v224 = vpop.f32.mrf.mxu0
  %v225 = vadd.f32 %v190, %v224
  %226 = vmatmul.f32.gmra.mxu0 %v45
  %v227 = vpop.f32.mrf.mxu0
  %v228 = vadd.f32 %v190, %v227
  %229 = vmatmul.f32.gmra.mxu0 %v46
  %v230 = vpop.f32.mrf.mxu0
  %v231 = vadd.f32 %v190, %v230
  %232 = vmatmul.f32.gmra.mxu0 %v47
  %v233 = vpop.f32.mrf.mxu0
  %v234 = vadd.f32 %v190, %v233
  %235 = vmatmul.f32.gmra.mxu0 %v48
  %v236 = vpop.f32.mrf.mxu0
  %v237 = vadd.f32 %v190, %v236
  %238 = vmatmul.f32.gmra.mxu0 %v49
  %v239 = vpop.f32.mrf.mxu0
  %v240 = vadd.f32 %v190, %v239
  %241 = vmatmul.f32.gmra.mxu0 %v50
  %v242 = vpop.f32.mrf.mxu0
  %v243 = vadd.f32 %v190, %v242
  %244 = vmatmul.f32.gmra.mxu0 %v51
  %v245 = vpop.f32.mrf.mxu0
  %v246 = vadd.f32 %v190, %v245
  %247 = vmatmul.f32.gmra.mxu0 %v52
  %v248 = vpop.f32.mrf.mxu0
  %v249 = vadd.f32 %v190, %v248
  %250 = vmatmul.f32.gmra.mxu0 %v53
  %v251 = vpop.f32.mrf.mxu0
  %v252 = vadd.f32 %v190, %v251
  %253 = vmatmul.f32.gmra.mxu0 %v54
  %v254 = vpop.f32.mrf.mxu0
  %v255 = vadd.f32 %v190, %v254
  %256 = vdwg.mxu0
  %v257 = vmul.f32 %v210, 0.1
  %v258 = vmul.f32 %v213, 0.1
  %v259 = vmul.f32 %v216, 0.1
  %v260 = vmul.f32 %v219, 0.1
  %v261 = vmul.f32 %v222, 0.1
  %v262 = vmul.f32 %v225, 0.1
  %v263 = vmul.f32 %v228, 0.1
  %v264 = vmul.f32 %v231, 0.1
  %v265 = vmul.f32 %v234, 0.1
  %v266 = vmul.f32 %v237, 0.1
  %v267 = vmul.f32 %v240, 0.1
  %v268 = vmul.f32 %v243, 0.1
  %v269 = vmul.f32 %v246, 0.1
  %v270 = vmul.f32 %v249, 0.1
  %v271 = vmul.f32 %v252, 0.1
  %v272 = vmul.f32 %v255, 0.1
  %v273 = vtanh.pop %v257
  %v274 = vtanh.pop %v258
  %v275 = vtanh.pop %v259
  %v276 = vtanh.pop %v260
  %v277 = vtanh.pop %v261
  %v278 = vtanh.pop %v262
  %v279 = vtanh.pop %v263
  %v280 = vtanh.pop %v264
  %v281 = vtanh.pop %v265
  %v282 = vtanh.pop %v266
  %v283 = vtanh.pop %v267
  %v284 = vtanh.pop %v268
  %v285 = vtanh.pop %v269
  %v286 = vtanh.pop %v270
  %v287 = vtanh.pop %v271
  %v288 = vtanh.pop %v272
  %289 = vmatpush.xpose.msra.mxu0 %v288
  %290 = vmatpush.xpose.msra.mxu0 %v287
  %291 = vmatpush.xpose.msra.mxu0 %v286
  %292 = vmatpush.xpose.msra.mxu0 %v285
  %293 = vmatpush.xpose.msra.mxu0 %v284
  %294 = vmatpush.xpose.msra.mxu0 %v283
  %295 = vmatpush.xpose.msra.mxu0 %v282
  %296 = vmatpush.xpose.msra.mxu0 %v281
  %297 = vmatpush.xpose.msra.mxu0 %v280
  %298 = vmatpush.xpose.msra.mxu0 %v279
  %299 = vmatpush.xpose.msra.mxu0 %v278
  %300 = vmatpush.xpose.msra.mxu0 %v277
  %301 = vmatpush.xpose.msra.mxu0 %v276
  %302 = vmatpush.xpose.msra.mxu0 %v275
  %303 = vmatpush.xpose.msra.mxu0 %v274
  %304 = vmatpush.xpose.msra.mxu0 %v273
  %305 = vmatmul.f32.gmra.mxu0 %v156
  %v306 = vpop.f32.mrf.mxu0
  %v307 = vadd.f32 0.0, %v306
  %308 = vmatmul.f32.gmra.mxu0 %v157
  %v309 = vpop.f32.mrf.mxu0
  %v310 = vadd.f32 0.0, %v309
  %311 = vmatmul.f32.gmra.mxu0 %v158
  %v312 = vpop.f32.mrf.mxu0
  %v313 = vadd.f32 0.0, %v312
  %314 = vmatmul.f32.gmra.mxu0 %v159
  %v315 = vpop.f32.mrf.mxu0
  %v316 = vadd.f32 0.0, %v315
  %317 = vmatmul.f32.gmra.mxu0 %v160
  %v318 = vpop.f32.mrf.mxu0
  %v319 = vadd.f32 0.0, %v318
  %320 = vmatmul.f32.gmra.mxu0 %v161
  %v321 = vpop.f32.mrf.mxu0
  %v322 = vadd.f32 0.0, %v321
  %323 = vmatmul.f32.gmra.mxu0 %v162
  %v324 = vpop.f32.mrf.mxu0
  %v325 = vadd.f32 0.0, %v324
  %326 = vmatmul.f32.gmra.mxu0 %v163
  %v327 = vpop.f32.mrf.mxu0
  %v328 = vadd.f32 0.0, %v327
  %329 = vmatmul.f32.gmra.mxu0 %v164
  %v330 = vpop.f32.mrf.mxu0
  %v331 = vadd.f32 0.0, %v330
  %332 = vmatmul.f32.gmra.mxu0 %v165
  %v333 = vpop.f32.mrf.mxu0
  %v334 = vadd.f32 0.0, %v333
  %335 = vmatmul.f32.gmra.mxu0 %v166
  %v336 = vpop.f32.mrf.mxu0
  %v337 = vadd.f32 0.0, %v336
  %338 = vmatmul.f32.gmra.mxu0 %v167
  %v339 = vpop.f32.mrf.mxu0
  %v340 = vadd.f32 0.0, %v339
  %341 = vmatmul.f32.gmra.mxu0 %v168
  %v342 = vpop.f32.mrf.mxu0
  %v343 = vadd.f32 0.0, %v342
  %344 = vmatmul.f32.gmra.mxu0 %v169
  %v345 = vpop.f32.mrf.mxu0
  %v346 = vadd.f32 0.0, %v345
  %347 = vmatmul.f32.gmra.mxu0 %v170
  %v348 = vpop.f32.mrf.mxu0
  %v349 = vadd.f32 0.0, %v348
  %350 = vmatmul.f32.gmra.mxu0 %v171
  %v351 = vpop.f32.mrf.mxu0
  %v352 = vadd.f32 0.0, %v351
  %353 = vdwg.mxu0
  %v354 = vmul.f32 %v307, 2.0
  %v355 = vmul.f32 %v310, 2.0
  %v356 = vmul.f32 %v313, 2.0
  %v357 = vmul.f32 %v316, 2.0
  %v358 = vmul.f32 %v319, 2.0
  %v359 = vmul.f32 %v322, 2.0
  %v360 = vmul.f32 %v325, 2.0
  %v361 = vmul.f32 %v328, 2.0
  %v362 = vmul.f32 %v331, 2.0
  %v363 = vmul.f32 %v334, 2.0
  %v364 = vmul.f32 %v337, 2.0
  %v365 = vmul.f32 %v340, 2.0
  %v366 = vmul.f32 %v343, 2.0
  %v367 = vmul.f32 %v346, 2.0
  %v368 = vmul.f32 %v349, 2.0
  %v369 = vmul.f32 %v352, 2.0
  %v370 = vxor.u32 %v354, 2147483648
  %v371 = vxor.u32 %v355, 2147483648
  %v372 = vxor.u32 %v356, 2147483648
  %v373 = vxor.u32 %v357, 2147483648
  %v374 = vxor.u32 %v358, 2147483648
  %v375 = vxor.u32 %v359, 2147483648
  %v376 = vxor.u32 %v360, 2147483648
  %v377 = vxor.u32 %v361, 2147483648
  %v378 = vxor.u32 %v362, 2147483648
  %v379 = vxor.u32 %v363, 2147483648
  %v380 = vxor.u32 %v364, 2147483648
  %v381 = vxor.u32 %v365, 2147483648
  %v382 = vxor.u32 %v366, 2147483648
  %v383 = vxor.u32 %v367, 2147483648
  %v384 = vxor.u32 %v368, 2147483648
  %v385 = vxor.u32 %v369, 2147483648
  %v386 = vmul.f32 %v370, 1.442695
  %v387 = vpow.pop %v386
  %v388 = vmul.f32 %v371, 1.442695
  %v389 = vpow.pop %v388
  %v390 = vmul.f32 %v372, 1.442695
  %v391 = vpow.pop %v390
  %v392 = vmul.f32 %v373, 1.442695
  %v393 = vpow.pop %v392
  %v394 = vmul.f32 %v374, 1.442695
  %v395 = vpow.pop %v394
  %v396 = vmul.f32 %v375, 1.442695
  %v397 = vpow.pop %v396
  %v398 = vmul.f32 %v376, 1.442695
  %v399 = vpow.pop %v398
  %v400 = vmul.f32 %v377, 1.442695
  %v401 = vpow.pop %v400
  %v402 = vmul.f32 %v378, 1.442695
  %v403 = vpow.pop %v402
  %v404 = vmul.f32 %v379, 1.442695
  %v405 = vpow.pop %v404
  %v406 = vmul.f32 %v380, 1.442695
  %v407 = vpow.pop %v406
  %v408 = vmul.f32 %v381, 1.442695
  %v409 = vpow.pop %v408
  %v410 = vmul.f32 %v382, 1.442695
  %v411 = vpow.pop %v410
  %v412 = vmul.f32 %v383, 1.442695
  %v413 = vpow.pop %v412
  %v414 = vmul.f32 %v384, 1.442695
  %v415 = vpow.pop %v414
  %v416 = vmul.f32 %v385, 1.442695
  %v417 = vpow.pop %v416
  %v418 = vadd.f32 %v387, 1.0
  %v419 = vadd.f32 %v389, 1.0
  %v420 = vadd.f32 %v391, 1.0
  %v421 = vadd.f32 %v393, 1.0
  %v422 = vadd.f32 %v395, 1.0
  %v423 = vadd.f32 %v397, 1.0
  %v424 = vadd.f32 %v399, 1.0
  %v425 = vadd.f32 %v401, 1.0
  %v426 = vadd.f32 %v403, 1.0
  %v427 = vadd.f32 %v405, 1.0
  %v428 = vadd.f32 %v407, 1.0
  %v429 = vadd.f32 %v409, 1.0
  %v430 = vadd.f32 %v411, 1.0
  %v431 = vadd.f32 %v413, 1.0
  %v432 = vadd.f32 %v415, 1.0
  %v433 = vadd.f32 %v417, 1.0
  %v434 = vrcp.pop %v418
  %v435 = vmul.f32 %v418, %v434
  %v436 = vsub.f32 1.0, %v435
  %v437 = vmul.f32 %v434, %v436
  %v438 = vadd.f32 %v434, %v437
  %vm439 = vweird.f32 %v418
  %vm440 = vweird.f32 %v434
  %vm441 = vmor %vm439, %vm440
  %v442 = vsel %vm441, %v434, %v438
  %v443 = vand.u32 2147483647, %v418
  %vm444 = vcmp.eq.f32.partialorder %v443, 8.507059e+37
  %v445 = vand.u32 %v418, 2147483648
  %v446 = vor.u32 1.1754944e-38, %v445
  %v447 = vsel %vm444, %v446, %v442
  %v448 = vmul.f32 1.0, %v447
  %v449 = vrcp.pop %v419
  %v450 = vmul.f32 %v419, %v449
  %v451 = vsub.f32 1.0, %v450
  %v452 = vmul.f32 %v449, %v451
  %v453 = vadd.f32 %v449, %v452
  %vm454 = vweird.f32 %v419
  %vm455 = vweird.f32 %v449
  %vm456 = vmor %vm454, %vm455
  %v457 = vsel %vm456, %v449, %v453
  %v458 = vand.u32 2147483647, %v419
  %vm459 = vcmp.eq.f32.partialorder %v458, 8.507059e+37
  %v460 = vand.u32 %v419, 2147483648
  %v461 = vor.u32 1.1754944e-38, %v460
  %v462 = vsel %vm459, %v461, %v457
  %v463 = vmul.f32 1.0, %v462
  %v464 = vrcp.pop %v420
  %v465 = vmul.f32 %v420, %v464
  %v466 = vsub.f32 1.0, %v465
  %v467 = vmul.f32 %v464, %v466
  %v468 = vadd.f32 %v464, %v467
  %vm469 = vweird.f32 %v420
  %vm470 = vweird.f32 %v464
  %vm471 = vmor %vm469, %vm470
  %v472 = vsel %vm471, %v464, %v468
  %v473 = vand.u32 2147483647, %v420
  %vm474 = vcmp.eq.f32.partialorder %v473, 8.507059e+37
  %v475 = vand.u32 %v420, 2147483648
  %v476 = vor.u32 1.1754944e-38, %v475
  %v477 = vsel %vm474, %v476, %v472
  %v478 = vmul.f32 1.0, %v477
  %v479 = vrcp.pop %v421
  %v480 = vmul.f32 %v421, %v479
  %v481 = vsub.f32 1.0, %v480
  %v482 = vmul.f32 %v479, %v481
  %v483 = vadd.f32 %v479, %v482
  %vm484 = vweird.f32 %v421
  %vm485 = vweird.f32 %v479
  %vm486 = vmor %vm484, %vm485
  %v487 = vsel %vm486, %v479, %v483
  %v488 = vand.u32 2147483647, %v421
  %vm489 = vcmp.eq.f32.partialorder %v488, 8.507059e+37
  %v490 = vand.u32 %v421, 2147483648
  %v491 = vor.u32 1.1754944e-38, %v490
  %v492 = vsel %vm489, %v491, %v487
  %v493 = vmul.f32 1.0, %v492
  %v494 = vrcp.pop %v422
  %v495 = vmul.f32 %v422, %v494
  %v496 = vsub.f32 1.0, %v495
  %v497 = vmul.f32 %v494, %v496
  %v498 = vadd.f32 %v494, %v497
  %vm499 = vweird.f32 %v422
  %vm500 = vweird.f32 %v494
  %vm501 = vmor %vm499, %vm500
  %v502 = vsel %vm501, %v494, %v498
  %v503 = vand.u32 2147483647, %v422
  %vm504 = vcmp.eq.f32.partialorder %v503, 8.507059e+37
  %v505 = vand.u32 %v422, 2147483648
  %v506 = vor.u32 1.1754944e-38, %v505
  %v507 = vsel %vm504, %v506, %v502
  %v508 = vmul.f32 1.0, %v507
  %v509 = vrcp.pop %v423
  %v510 = vmul.f32 %v423, %v509
  %v511 = vsub.f32 1.0, %v510
  %v512 = vmul.f32 %v509, %v511
  %v513 = vadd.f32 %v509, %v512
  %vm514 = vweird.f32 %v423
  %vm515 = vweird.f32 %v509
  %vm516 = vmor %vm514, %vm515
  %v517 = vsel %vm516, %v509, %v513
  %v518 = vand.u32 2147483647, %v423
  %vm519 = vcmp.eq.f32.partialorder %v518, 8.507059e+37
  %v520 = vand.u32 %v423, 2147483648
  %v521 = vor.u32 1.1754944e-38, %v520
  %v522 = vsel %vm519, %v521, %v517
  %v523 = vmul.f32 1.0, %v522
  %v524 = vrcp.pop %v424
  %v525 = vmul.f32 %v424, %v524
  %v526 = vsub.f32 1.0, %v525
  %v527 = vmul.f32 %v524, %v526
  %v528 = vadd.f32 %v524, %v527
  %vm529 = vweird.f32 %v424
  %vm530 = vweird.f32 %v524
  %vm531 = vmor %vm529, %vm530
  %v532 = vsel %vm531, %v524, %v528
  %v533 = vand.u32 2147483647, %v424
  %vm534 = vcmp.eq.f32.partialorder %v533, 8.507059e+37
  %v535 = vand.u32 %v424, 2147483648
  %v536 = vor.u32 1.1754944e-38, %v535
  %v537 = vsel %vm534, %v536, %v532
  %v538 = vmul.f32 1.0, %v537
  %v539 = vrcp.pop %v425
  %v540 = vmul.f32 %v425, %v539
  %v541 = vsub.f32 1.0, %v540
  %v542 = vmul.f32 %v539, %v541
  %v543 = vadd.f32 %v539, %v542
  %vm544 = vweird.f32 %v425
  %vm545 = vweird.f32 %v539
  %vm546 = vmor %vm544, %vm545
  %v547 = vsel %vm546, %v539, %v543
  %v548 = vand.u32 2147483647, %v425
  %vm549 = vcmp.eq.f32.partialorder %v548, 8.507059e+37
  %v550 = vand.u32 %v425, 2147483648
  %v551 = vor.u32 1.1754944e-38, %v550
  %v552 = vsel %vm549, %v551, %v547
  %v553 = vmul.f32 1.0, %v552
  %v554 = vrcp.pop %v426
  %v555 = vmul.f32 %v426, %v554
  %v556 = vsub.f32 1.0, %v555
  %v557 = vmul.f32 %v554, %v556
  %v558 = vadd.f32 %v554, %v557
  %vm559 = vweird.f32 %v426
  %vm560 = vweird.f32 %v554
  %vm561 = vmor %vm559, %vm560
  %v562 = vsel %vm561, %v554, %v558
  %v563 = vand.u32 2147483647, %v426
  %vm564 = vcmp.eq.f32.partialorder %v563, 8.507059e+37
  %v565 = vand.u32 %v426, 2147483648
  %v566 = vor.u32 1.1754944e-38, %v565
  %v567 = vsel %vm564, %v566, %v562
  %v568 = vmul.f32 1.0, %v567
  %v569 = vrcp.pop %v427
  %v570 = vmul.f32 %v427, %v569
  %v571 = vsub.f32 1.0, %v570
  %v572 = vmul.f32 %v569, %v571
  %v573 = vadd.f32 %v569, %v572
  %vm574 = vweird.f32 %v427
  %vm575 = vweird.f32 %v569
  %vm576 = vmor %vm574, %vm575
  %v577 = vsel %vm576, %v569, %v573
  %v578 = vand.u32 2147483647, %v427
  %vm579 = vcmp.eq.f32.partialorder %v578, 8.507059e+37
  %v580 = vand.u32 %v427, 2147483648
  %v581 = vor.u32 1.1754944e-38, %v580
  %v582 = vsel %vm579, %v581, %v577
  %v583 = vmul.f32 1.0, %v582
  %v584 = vrcp.pop %v428
  %v585 = vmul.f32 %v428, %v584
  %v586 = vsub.f32 1.0, %v585
  %v587 = vmul.f32 %v584, %v586
  %v588 = vadd.f32 %v584, %v587
  %vm589 = vweird.f32 %v428
  %vm590 = vweird.f32 %v584
  %vm591 = vmor %vm589, %vm590
  %v592 = vsel %vm591, %v584, %v588
  %v593 = vand.u32 2147483647, %v428
  %vm594 = vcmp.eq.f32.partialorder %v593, 8.507059e+37
  %v595 = vand.u32 %v428, 2147483648
  %v596 = vor.u32 1.1754944e-38, %v595
  %v597 = vsel %vm594, %v596, %v592
  %v598 = vmul.f32 1.0, %v597
  %v599 = vrcp.pop %v429
  %v600 = vmul.f32 %v429, %v599
  %v601 = vsub.f32 1.0, %v600
  %v602 = vmul.f32 %v599, %v601
  %v603 = vadd.f32 %v599, %v602
  %vm604 = vweird.f32 %v429
  %vm605 = vweird.f32 %v599
  %vm606 = vmor %vm604, %vm605
  %v607 = vsel %vm606, %v599, %v603
  %v608 = vand.u32 2147483647, %v429
  %vm609 = vcmp.eq.f32.partialorder %v608, 8.507059e+37
  %v610 = vand.u32 %v429, 2147483648
  %v611 = vor.u32 1.1754944e-38, %v610
  %v612 = vsel %vm609, %v611, %v607
  %v613 = vmul.f32 1.0, %v612
  %v614 = vrcp.pop %v430
  %v615 = vmul.f32 %v430, %v614
  %v616 = vsub.f32 1.0, %v615
  %v617 = vmul.f32 %v614, %v616
  %v618 = vadd.f32 %v614, %v617
  %vm619 = vweird.f32 %v430
  %vm620 = vweird.f32 %v614
  %vm621 = vmor %vm619, %vm620
  %v622 = vsel %vm621, %v614, %v618
  %v623 = vand.u32 2147483647, %v430
  %vm624 = vcmp.eq.f32.partialorder %v623, 8.507059e+37
  %v625 = vand.u32 %v430, 2147483648
  %v626 = vor.u32 1.1754944e-38, %v625
  %v627 = vsel %vm624, %v626, %v622
  %v628 = vmul.f32 1.0, %v627
  %v629 = vrcp.pop %v431
  %v630 = vmul.f32 %v431, %v629
  %v631 = vsub.f32 1.0, %v630
  %v632 = vmul.f32 %v629, %v631
  %v633 = vadd.f32 %v629, %v632
  %vm634 = vweird.f32 %v431
  %vm635 = vweird.f32 %v629
  %vm636 = vmor %vm634, %vm635
  %v637 = vsel %vm636, %v629, %v633
  %v638 = vand.u32 2147483647, %v431
  %vm639 = vcmp.eq.f32.partialorder %v638, 8.507059e+37
  %v640 = vand.u32 %v431, 2147483648
  %v641 = vor.u32 1.1754944e-38, %v640
  %v642 = vsel %vm639, %v641, %v637
  %v643 = vmul.f32 1.0, %v642
  %v644 = vrcp.pop %v432
  %v645 = vmul.f32 %v432, %v644
  %v646 = vsub.f32 1.0, %v645
  %v647 = vmul.f32 %v644, %v646
  %v648 = vadd.f32 %v644, %v647
  %vm649 = vweird.f32 %v432
  %vm650 = vweird.f32 %v644
  %vm651 = vmor %vm649, %vm650
  %v652 = vsel %vm651, %v644, %v648
  %v653 = vand.u32 2147483647, %v432
  %vm654 = vcmp.eq.f32.partialorder %v653, 8.507059e+37
  %v655 = vand.u32 %v432, 2147483648
  %v656 = vor.u32 1.1754944e-38, %v655
  %v657 = vsel %vm654, %v656, %v652
  %v658 = vmul.f32 1.0, %v657
  %v659 = vrcp.pop %v433
  %v660 = vmul.f32 %v433, %v659
  %v661 = vsub.f32 1.0, %v660
  %v662 = vmul.f32 %v659, %v661
  %v663 = vadd.f32 %v659, %v662
  %vm664 = vweird.f32 %v433
  %vm665 = vweird.f32 %v659
  %vm666 = vmor %vm664, %vm665
  %v667 = vsel %vm666, %v659, %v663
  %v668 = vand.u32 2147483647, %v433
  %vm669 = vcmp.eq.f32.partialorder %v668, 8.507059e+37
  %v670 = vand.u32 %v433, 2147483648
  %v671 = vor.u32 1.1754944e-38, %v670
  %v672 = vsel %vm669, %v671, %v667
  %v673 = vmul.f32 1.0, %v672
  %674 = vst [vmem:[%s6] sm:$0xff] %v448
  %675 = vst [vmem:[%s6 + $0x8] sm:$0xff] %v463
  %676 = vst [vmem:[%s6 + $0x10] sm:$0xff] %v478
  %677 = vst [vmem:[%s6 + $0x18] sm:$0xff] %v493
  %678 = vst [vmem:[%s6 + $0x20] sm:$0xff] %v508
  %679 = vst [vmem:[%s6 + $0x28] sm:$0xff] %v523
  %680 = vst [vmem:[%s6 + $0x30] sm:$0xff] %v538
  %681 = vst [vmem:[%s6 + $0x38] sm:$0xff] %v553
  %682 = vst [vmem:[%s6 + $0x40] sm:$0xff] %v568
  %683 = vst [vmem:[%s6 + $0x48] sm:$0xff] %v583
  %684 = vst [vmem:[%s6 + $0x50] sm:$0xff] %v598
  %685 = vst [vmem:[%s6 + $0x58] sm:$0xff] %v613
  %686 = vst [vmem:[%s6 + $0x60] sm:$0xff] %v628
  %687 = vst [vmem:[%s6 + $0x68] sm:$0xff] %v643
  %688 = vst [vmem:[%s6 + $0x70] sm:$0xff] %v658
  %689 = vst [vmem:[%s6 + $0x78] sm:$0xff] %v673
  // Predicated region
  $region26: #{edge_structure_learner_forward.2} parent=0 // pred_check
    _
  $region27: #{edge_structure_learner_forward.2} parent=0 // pred_check_branch
    %691 = sbr.rel (0) target = $region29
  $region28: #{edge_structure_learner_forward.2} parent=0 // pred_region
    _
  $region29: #{edge_structure_learner_forward.2} parent=0 // pred_fallthru
    _
  // Predicated region
  $region30: #{edge_structure_learner_forward.2} parent=0 // pred_check
    _
  $region31: #{edge_structure_learner_forward.2} parent=0 // pred_check_branch
    %693 = sbr.rel (0) target = $region33
  $region32: #{edge_structure_learner_forward.2} parent=0 // pred_region
    _
  $region33: #{edge_structure_learner_forward.2} parent=0 // pred_fallthru
    _

</llo_original>
